<compile_context>
chip_gen: v6e
topology: v6e:2x2x1
jax: 0.10.0
libtpu: 0.0.40
codegen_flags: <defaults>
</compile_context>

<pallas_src>
import functools

import jax
import jax.numpy as jnp
import numpy as np
from jax.experimental import pallas as pl
from jax.experimental.pallas import tpu as pltpu


# ----------------------------------------------------------------------------
# Fused kernel: grid = (batch, layer).  Refs:
#   x_ref    (1, C, HW)       input image, fetched once per batch element
#   w1_ref   (L, 9, Ch, C)    3x3 conv weights, per-tap slabs, bf16, resident
#   w2_ref   (L, C, Ch)       1x1 conv weights (output-major), bf16, resident
#   mask_ref (9, HW)          0/1 border masks per tap (zero "SAME" padding)
#   o_ref    (1, C, HW)       output (written only at the last layer)
#   acc_ref  (C, HW) f32      residual stream, persists across the layer axis
# ----------------------------------------------------------------------------
def _residual_stack_kernel(x_ref, w1_ref, w2_ref, mask_ref, o_ref,
                           acc_ref, *, width):
    layer = pl.program_id(1)
    num_layers = pl.num_programs(1)

    @pl.when(layer == 0)
    def _():
        acc_ref[...] = x_ref[0].astype(jnp.float32)

    x = acc_ref[...]                        # (C, HW) f32 residual stream
    a = jnp.maximum(x, 0.0)                 # ReLU before the 3x3 conv (f32 VPU)
    hw = a.shape[1]
    ch = w1_ref.shape[2]

    # 3x3 conv as 9 per-tap MXU accumulations (no materialized im2col).
    # Tap t = (dy+1)*3 + (dx+1); lane-roll + 0/1 border mask reproduces
    # zero "SAME" padding exactly.
    h = jnp.zeros((ch, hw), jnp.float32)
    t = 0
    for dy in (-1, 0, 1):
        for dx in (-1, 0, 1):
            off = dy * width + dx           # flattened source offset
            if off == 0:
                tap = a                     # center tap, mask is all ones
            else:
                shifted = pltpu.roll(a, shift=(-off) % hw, axis=1)
                tap = shifted * mask_ref[pl.ds(t, 1), :]     # (C,HW)*(1,HW)
            w1_t = w1_ref[layer, t]         # (Ch, C) bf16, VMEM-resident
            h = h + jnp.dot(w1_t, tap.astype(jnp.bfloat16),
                            preferred_element_type=jnp.float32)
            t += 1

    h = jnp.maximum(h, 0.0)                 # ReLU after the 3x3 conv
    # 1x1 conv: (C, Ch) @ (Ch, HW) -> (C, HW).
    y = jnp.dot(w2_ref[layer], h.astype(jnp.bfloat16),
                preferred_element_type=jnp.float32)

    new_x = x + y                           # residual connection
    acc_ref[...] = new_x

    @pl.when(layer == num_layers - 1)
    def _():                                # stack's trailing F.relu
        o_ref[0] = jnp.maximum(new_x, 0.0).astype(o_ref.dtype)


def residual_stack_forward(x_nchw, params):
    """params: list of (w1 (3,3,C,Ch), w2 (Ch,C)) per layer. NCHW in/out."""
    N, C, H, W = x_nchw.shape
    HW = H * W
    L = len(params)
    Ch = params[0][0].shape[-1]

    # Activations: collapse H*W onto the lane axis (free reshape); no channel
    # padding / extra HBM copies in the wrapper.
    x2 = x_nchw.reshape(N, C, HW)

    # Weights: (L, 9, Ch, C) per-tap slabs for the 3x3 conv, (L, C, Ch)
    # output-major for the 1x1 conv; bf16 operands for MXU throughput.
    w1_list, w2_list = [], []
    for w1, w2 in params:
        w1_list.append(jnp.transpose(w1.reshape(9, C, Ch), (0, 2, 1)))  # (9,Ch,C)
        w2_list.append(jnp.transpose(w2))                               # (C,Ch)
    w1s = jnp.stack(w1_list).astype(jnp.bfloat16)   # (L, 9, Ch, C)
    w2s = jnp.stack(w2_list).astype(jnp.bfloat16)   # (L, C, Ch)

    # Precomputed 0/1 border masks per tap (host-side, tiny).
    h_idx, w_idx = np.divmod(np.arange(HW), W)
    masks = []
    for dy in (-1, 0, 1):
        for dx in (-1, 0, 1):
            m = ((h_idx + dy >= 0) & (h_idx + dy < H) &
                 (w_idx + dx >= 0) & (w_idx + dx < W))
            masks.append(m)
    tap_mask = jnp.asarray(np.stack(masks).astype(np.float32))   # (9, HW)

    # Explicit VMEM budget: f32 acc scratch + double-buffered x/out blocks
    # + grid-resident weights/masks, with headroom.
    xb = np.dtype(x_nchw.dtype).itemsize
    vmem_bytes = (C * HW * 4                      # residual accumulator (f32)
                  + 2 * C * HW * xb               # input block (double-buffered)
                  + 2 * C * HW * xb               # output block (double-buffered)
                  + 2 * (w1s.size * 2 + w2s.size * 2 + tap_mask.size * 4))
    vmem_limit = min(max(int(1.5 * vmem_bytes) + (2 << 20), 16 << 20), 64 << 20)

    kernel = functools.partial(_residual_stack_kernel, width=W)
    out = pl.pallas_call(
        kernel,
        out_shape=jax.ShapeDtypeStruct((N, C, HW), x_nchw.dtype),
        grid=(N, L),
        in_specs=[
            pl.BlockSpec((1, C, HW), lambda n, l: (n, 0, 0)),        # x per batch
            pl.BlockSpec((L, 9, Ch, C), lambda n, l: (0, 0, 0, 0)),  # w1 resident
            pl.BlockSpec((L, C, Ch), lambda n, l: (0, 0, 0)),        # w2 resident
            pl.BlockSpec((9, HW), lambda n, l: (0, 0)),              # masks resident
        ],
        out_specs=pl.BlockSpec((1, C, HW), lambda n, l: (n, 0, 0)),
        scratch_shapes=[
            pltpu.VMEM((C, HW), jnp.float32),     # residual stream accumulator
        ],
        compiler_params=pltpu.CompilerParams(
            dimension_semantics=("parallel", "arbitrary"),
            vmem_limit_bytes=vmem_limit),
    )(x2, w1s, w2s, tap_mask)

    return out.reshape(N, C, H, W)


# ----------------------------------------------------------------------------
# Deterministic parameter init (matches Conv2d default init *distribution*:
# uniform(-1/sqrt(fan_in), 1/sqrt(fan_in)); no bias, as in the module).
# ----------------------------------------------------------------------------
def init_params(key, channels, num_residual_layers, num_residual_hidden):
    params = []
    for i in range(num_residual_layers):
        k1, k2 = jax.random.split(jax.random.fold_in(key, i))
        b1 = 1.0 / np.sqrt(channels * 3 * 3)
        w1 = jax.random.uniform(k1, (3, 3, channels, num_residual_hidden),
                                jnp.float32, -b1, b1)
        b2 = 1.0 / np.sqrt(num_residual_hidden * 1 * 1)
        w2 = jax.random.uniform(k2, (num_residual_hidden, channels),
                                jnp.float32, -b2, b2)
        params.append((w1, w2))
    return params


# ----------------------------------------------------------------------------
# Pure-JAX reference (for correctness checking of the Pallas kernel).
# ----------------------------------------------------------------------------
def residual_stack_reference(x_nchw, params):
    x = x_nchw
    for w1, w2 in params:
        a = jax.nn.relu(x)
        w1_oihw = jnp.transpose(w1, (3, 2, 0, 1))                # OIHW
        h = jax.lax.conv_general_dilated(
            a, w1_oihw, window_strides=(1, 1), padding="SAME",
            dimension_numbers=("NCHW", "OIHW", "NCHW"))
        h = jax.nn.relu(h)
        w2_oihw = jnp.transpose(w2, (1, 0))[:, :, None, None]    # (C, Ch, 1, 1)
        y = jax.lax.conv_general_dilated(
            h, w2_oihw, window_strides=(1, 1), padding="VALID",
            dimension_numbers=("NCHW", "OIHW", "NCHW"))
        x = x + y
    return jax.nn.relu(x)


if __name__ == "__main__":
    # Small shapes consistent with the module.
    batch, channels, spatial = 2, 4, 16
    num_residual_layers, num_residual_hidden = 2, 8

    key = jax.random.PRNGKey(0)
    kx, kp = jax.random.split(key)
    x = jax.random.normal(kx, (batch, channels, spatial, spatial), jnp.float32)
    params = init_params(kp, channels, num_residual_layers, num_residual_hidden)

    out = residual_stack_forward(x, params)
    out = jax.block_until_ready(out)

    ref = residual_stack_reference(x, params)
    assert out.shape == ref.shape
    # Tolerance loosened vs the pure-f32 reference because matmul operands are bf16.
    if not bool(jnp.allclose(out, ref, atol=3e-2, rtol=3e-2)):
        raise AssertionError("Pallas kernel output mismatch vs JAX reference")

    print("KERNEL_OK")
</pallas_src>

<mosaic_0001>
module attributes {stable_mosaic.version = 11 : i64} {
  func.func @_residual_stack_kernel(%arg0: i32, %arg1: i32, %arg2: memref<1x4x256xf32, #tpu.memory_space<vmem>>, %arg3: memref<2x9x8x4xbf16, #tpu.memory_space<vmem>>, %arg4: memref<2x4x8xbf16, #tpu.memory_space<vmem>>, %arg5: memref<9x256xf32, #tpu.memory_space<vmem>>, %arg6: memref<1x4x256xf32, #tpu.memory_space<vmem>>, %arg7: memref<4x256xf32, #tpu.memory_space<vmem>>) attributes {dimension_semantics = [#tpu.dimension_semantics<parallel>, #tpu.dimension_semantics<arbitrary>], iteration_bounds = array<i64: 2, 2>, scalar_prefetch = 0 : i64, scratch_operands = 1 : i64, tpu.core_type = #tpu.core_type<tc>, window_params = [{transform_indices = @transform_0, window_bounds = array<i64: 1, 4, 256>}, {pipeline_mode = #tpu.pipeline_mode<synchronous>, transform_indices = @transform_1, window_bounds = array<i64: 2, 9, 8, 4>}, {pipeline_mode = #tpu.pipeline_mode<synchronous>, transform_indices = @transform_2, window_bounds = array<i64: 2, 4, 8>}, {pipeline_mode = #tpu.pipeline_mode<synchronous>, transform_indices = @transform_3, window_bounds = array<i64: 9, 256>}, {transform_indices = @transform_4, window_bounds = array<i64: 1, 4, 256>}]} {
    %c0_i32 = arith.constant 0 : i32
    %0 = arith.cmpi eq, %arg1, %c0_i32 : i32
    %1 = arith.extui %0 : i1 to i32
    %c0_i32_0 = arith.constant 0 : i32
    %2 = arith.cmpi ne, %1, %c0_i32_0 : i32
    scf.if %2 {
      %c0_55 = arith.constant 0 : index
      %c0_56 = arith.constant 0 : index
      %c0_57 = arith.constant 0 : index
      %105 = vector.load %arg2[%c0_55, %c0_56, %c0_57] : memref<1x4x256xf32, #tpu.memory_space<vmem>>, vector<1x4x256xf32>
      %106 = vector.shape_cast %105 : vector<1x4x256xf32> to vector<4x256xf32>
      %c0_58 = arith.constant 0 : index
      %c0_59 = arith.constant 0 : index
      %107 = vector.load %arg7[%c0_58, %c0_59] : memref<4x256xf32, #tpu.memory_space<vmem>>, vector<4x256xf32>
      tpu.vector_store %arg7[%c0_58, %c0_59], %106 {strides = array<i32>} : memref<4x256xf32, #tpu.memory_space<vmem>>, vector<4x256xf32>,
    } else {
    }
    %c0 = arith.constant 0 : index
    %c0_1 = arith.constant 0 : index
    %3 = vector.load %arg7[%c0, %c0_1] : memref<4x256xf32, #tpu.memory_space<vmem>>, vector<4x256xf32>
    %cst = arith.constant 0.000000e+00 : f32
    %4 = vector.broadcast %cst : f32 to vector<4x256xf32>
    %5 = arith.maximumf %3, %4 : vector<4x256xf32>
    %cst_2 = arith.constant 0.000000e+00 : f32
    %6 = vector.broadcast %cst_2 : f32 to vector<8x256xf32>
    %c17_i32 = arith.constant 17 : i32
    %7 = tpu.dynamic_rotate %5 by %c17_i32 dim 1 : vector<4x256xf32>, i32 -> vector<4x256xf32>
    %c0_3 = arith.constant 0 : index
    %c0_4 = arith.constant 0 : index
    %8 = vector.load %arg5[%c0_3, %c0_4] : memref<9x256xf32, #tpu.memory_space<vmem>>, vector<1x256xf32>
    %9 = vector.broadcast %8 : vector<1x256xf32> to vector<4x256xf32>
    %10 = arith.mulf %7, %9 : vector<4x256xf32>
    %11 = arith.index_cast %arg1 : i32 to index
    %c0_5 = arith.constant 0 : index
    %c0_6 = arith.constant 0 : index
    %c0_7 = arith.constant 0 : index
    %12 = vector.load %arg3[%11, %c0_5, %c0_6, %c0_7] : memref<2x9x8x4xbf16, #tpu.memory_space<vmem>>, vector<1x1x8x4xbf16>
    %13 = vector.shape_cast %12 : vector<1x1x8x4xbf16> to vector<8x4xbf16>
    %14 = arith.truncf %10 : vector<4x256xf32> to vector<4x256xbf16>
    %cst_8 = arith.constant dense<0.000000e+00> : vector<8x256xf32>
    %15 = tpu.matmul %13, %14, %cst_8 {dimension_numbers = #tpu.dot_dimension_numbers<[1], [0], [0], [1], [0, 0, 1, 1], [], []>} : vector<8x4xbf16>, vector<4x256xbf16>, vector<8x256xf32> -> vector<8x256xf32>
    %16 = arith.addf %6, %15 : vector<8x256xf32>
    %c16_i32 = arith.constant 16 : i32
    %17 = tpu.dynamic_rotate %5 by %c16_i32 dim 1 : vector<4x256xf32>, i32 -> vector<4x256xf32>
    %c1 = arith.constant 1 : index
    %c0_9 = arith.constant 0 : index
    %18 = vector.load %arg5[%c1, %c0_9] : memref<9x256xf32, #tpu.memory_space<vmem>>, vector<1x256xf32>
    %19 = vector.broadcast %18 : vector<1x256xf32> to vector<4x256xf32>
    %20 = arith.mulf %17, %19 : vector<4x256xf32>
    %21 = arith.index_cast %arg1 : i32 to index
    %c1_10 = arith.constant 1 : index
    %c0_11 = arith.constant 0 : index
    %c0_12 = arith.constant 0 : index
    %22 = vector.load %arg3[%21, %c1_10, %c0_11, %c0_12] : memref<2x9x8x4xbf16, #tpu.memory_space<vmem>>, vector<1x1x8x4xbf16>
    %23 = vector.shape_cast %22 : vector<1x1x8x4xbf16> to vector<8x4xbf16>
    %24 = arith.truncf %20 : vector<4x256xf32> to vector<4x256xbf16>
    %cst_13 = arith.constant dense<0.000000e+00> : vector<8x256xf32>
    %25 = tpu.matmul %23, %24, %cst_13 {dimension_numbers = #tpu.dot_dimension_numbers<[1], [0], [0], [1], [0, 0, 1, 1], [], []>} : vector<8x4xbf16>, vector<4x256xbf16>, vector<8x256xf32> -> vector<8x256xf32>
    %26 = arith.addf %16, %25 : vector<8x256xf32>
    %c15_i32 = arith.constant 15 : i32
    %27 = tpu.dynamic_rotate %5 by %c15_i32 dim 1 : vector<4x256xf32>, i32 -> vector<4x256xf32>
    %c2 = arith.constant 2 : index
    %c0_14 = arith.constant 0 : index
    %28 = vector.load %arg5[%c2, %c0_14] : memref<9x256xf32, #tpu.memory_space<vmem>>, vector<1x256xf32>
    %29 = vector.broadcast %28 : vector<1x256xf32> to vector<4x256xf32>
    %30 = arith.mulf %27, %29 : vector<4x256xf32>
    %31 = arith.index_cast %arg1 : i32 to index
    %c2_15 = arith.constant 2 : index
    %c0_16 = arith.constant 0 : index
    %c0_17 = arith.constant 0 : index
    %32 = vector.load %arg3[%31, %c2_15, %c0_16, %c0_17] : memref<2x9x8x4xbf16, #tpu.memory_space<vmem>>, vector<1x1x8x4xbf16>
    %33 = vector.shape_cast %32 : vector<1x1x8x4xbf16> to vector<8x4xbf16>
    %34 = arith.truncf %30 : vector<4x256xf32> to vector<4x256xbf16>
    %cst_18 = arith.constant dense<0.000000e+00> : vector<8x256xf32>
    %35 = tpu.matmul %33, %34, %cst_18 {dimension_numbers = #tpu.dot_dimension_numbers<[1], [0], [0], [1], [0, 0, 1, 1], [], []>} : vector<8x4xbf16>, vector<4x256xbf16>, vector<8x256xf32> -> vector<8x256xf32>
    %36 = arith.addf %26, %35 : vector<8x256xf32>
    %c1_i32 = arith.constant 1 : i32
    %37 = tpu.dynamic_rotate %5 by %c1_i32 dim 1 : vector<4x256xf32>, i32 -> vector<4x256xf32>
    %c3 = arith.constant 3 : index
    %c0_19 = arith.constant 0 : index
    %38 = vector.load %arg5[%c3, %c0_19] : memref<9x256xf32, #tpu.memory_space<vmem>>, vector<1x256xf32>
    %39 = vector.broadcast %38 : vector<1x256xf32> to vector<4x256xf32>
    %40 = arith.mulf %37, %39 : vector<4x256xf32>
    %41 = arith.index_cast %arg1 : i32 to index
    %c3_20 = arith.constant 3 : index
    %c0_21 = arith.constant 0 : index
    %c0_22 = arith.constant 0 : index
    %42 = vector.load %arg3[%41, %c3_20, %c0_21, %c0_22] : memref<2x9x8x4xbf16, #tpu.memory_space<vmem>>, vector<1x1x8x4xbf16>
    %43 = vector.shape_cast %42 : vector<1x1x8x4xbf16> to vector<8x4xbf16>
    %44 = arith.truncf %40 : vector<4x256xf32> to vector<4x256xbf16>
    %cst_23 = arith.constant dense<0.000000e+00> : vector<8x256xf32>
    %45 = tpu.matmul %43, %44, %cst_23 {dimension_numbers = #tpu.dot_dimension_numbers<[1], [0], [0], [1], [0, 0, 1, 1], [], []>} : vector<8x4xbf16>, vector<4x256xbf16>, vector<8x256xf32> -> vector<8x256xf32>
    %46 = arith.addf %36, %45 : vector<8x256xf32>
    %47 = arith.index_cast %arg1 : i32 to index
    %c4 = arith.constant 4 : index
    %c0_24 = arith.constant 0 : index
    %c0_25 = arith.constant 0 : index
    %48 = vector.load %arg3[%47, %c4, %c0_24, %c0_25] : memref<2x9x8x4xbf16, #tpu.memory_space<vmem>>, vector<1x1x8x4xbf16>
    %49 = vector.shape_cast %48 : vector<1x1x8x4xbf16> to vector<8x4xbf16>
    %50 = arith.truncf %5 : vector<4x256xf32> to vector<4x256xbf16>
    %cst_26 = arith.constant dense<0.000000e+00> : vector<8x256xf32>
    %51 = tpu.matmul %49, %50, %cst_26 {dimension_numbers = #tpu.dot_dimension_numbers<[1], [0], [0], [1], [0, 0, 1, 1], [], []>} : vector<8x4xbf16>, vector<4x256xbf16>, vector<8x256xf32> -> vector<8x256xf32>
    %52 = arith.addf %46, %51 : vector<8x256xf32>
    %c255_i32 = arith.constant 255 : i32
    %53 = tpu.dynamic_rotate %5 by %c255_i32 dim 1 : vector<4x256xf32>, i32 -> vector<4x256xf32>
    %c5 = arith.constant 5 : index
    %c0_27 = arith.constant 0 : index
    %54 = vector.load %arg5[%c5, %c0_27] : memref<9x256xf32, #tpu.memory_space<vmem>>, vector<1x256xf32>
    %55 = vector.broadcast %54 : vector<1x256xf32> to vector<4x256xf32>
    %56 = arith.mulf %53, %55 : vector<4x256xf32>
    %57 = arith.index_cast %arg1 : i32 to index
    %c5_28 = arith.constant 5 : index
    %c0_29 = arith.constant 0 : index
    %c0_30 = arith.constant 0 : index
    %58 = vector.load %arg3[%57, %c5_28, %c0_29, %c0_30] : memref<2x9x8x4xbf16, #tpu.memory_space<vmem>>, vector<1x1x8x4xbf16>
    %59 = vector.shape_cast %58 : vector<1x1x8x4xbf16> to vector<8x4xbf16>
    %60 = arith.truncf %56 : vector<4x256xf32> to vector<4x256xbf16>
    %cst_31 = arith.constant dense<0.000000e+00> : vector<8x256xf32>
    %61 = tpu.matmul %59, %60, %cst_31 {dimension_numbers = #tpu.dot_dimension_numbers<[1], [0], [0], [1], [0, 0, 1, 1], [], []>} : vector<8x4xbf16>, vector<4x256xbf16>, vector<8x256xf32> -> vector<8x256xf32>
    %62 = arith.addf %52, %61 : vector<8x256xf32>
    %c241_i32 = arith.constant 241 : i32
    %63 = tpu.dynamic_rotate %5 by %c241_i32 dim 1 : vector<4x256xf32>, i32 -> vector<4x256xf32>
    %c6 = arith.constant 6 : index
    %c0_32 = arith.constant 0 : index
    %64 = vector.load %arg5[%c6, %c0_32] : memref<9x256xf32, #tpu.memory_space<vmem>>, vector<1x256xf32>
    %65 = vector.broadcast %64 : vector<1x256xf32> to vector<4x256xf32>
    %66 = arith.mulf %63, %65 : vector<4x256xf32>
    %67 = arith.index_cast %arg1 : i32 to index
    %c6_33 = arith.constant 6 : index
    %c0_34 = arith.constant 0 : index
    %c0_35 = arith.constant 0 : index
    %68 = vector.load %arg3[%67, %c6_33, %c0_34, %c0_35] : memref<2x9x8x4xbf16, #tpu.memory_space<vmem>>, vector<1x1x8x4xbf16>
    %69 = vector.shape_cast %68 : vector<1x1x8x4xbf16> to vector<8x4xbf16>
    %70 = arith.truncf %66 : vector<4x256xf32> to vector<4x256xbf16>
    %cst_36 = arith.constant dense<0.000000e+00> : vector<8x256xf32>
    %71 = tpu.matmul %69, %70, %cst_36 {dimension_numbers = #tpu.dot_dimension_numbers<[1], [0], [0], [1], [0, 0, 1, 1], [], []>} : vector<8x4xbf16>, vector<4x256xbf16>, vector<8x256xf32> -> vector<8x256xf32>
    %72 = arith.addf %62, %71 : vector<8x256xf32>
    %c240_i32 = arith.constant 240 : i32
    %73 = tpu.dynamic_rotate %5 by %c240_i32 dim 1 : vector<4x256xf32>, i32 -> vector<4x256xf32>
    %c7 = arith.constant 7 : index
    %c0_37 = arith.constant 0 : index
    %74 = vector.load %arg5[%c7, %c0_37] : memref<9x256xf32, #tpu.memory_space<vmem>>, vector<1x256xf32>
    %75 = vector.broadcast %74 : vector<1x256xf32> to vector<4x256xf32>
    %76 = arith.mulf %73, %75 : vector<4x256xf32>
    %77 = arith.index_cast %arg1 : i32 to index
    %c7_38 = arith.constant 7 : index
    %c0_39 = arith.constant 0 : index
    %c0_40 = arith.constant 0 : index
    %78 = vector.load %arg3[%77, %c7_38, %c0_39, %c0_40] : memref<2x9x8x4xbf16, #tpu.memory_space<vmem>>, vector<1x1x8x4xbf16>
    %79 = vector.shape_cast %78 : vector<1x1x8x4xbf16> to vector<8x4xbf16>
    %80 = arith.truncf %76 : vector<4x256xf32> to vector<4x256xbf16>
    %cst_41 = arith.constant dense<0.000000e+00> : vector<8x256xf32>
    %81 = tpu.matmul %79, %80, %cst_41 {dimension_numbers = #tpu.dot_dimension_numbers<[1], [0], [0], [1], [0, 0, 1, 1], [], []>} : vector<8x4xbf16>, vector<4x256xbf16>, vector<8x256xf32> -> vector<8x256xf32>
    %82 = arith.addf %72, %81 : vector<8x256xf32>
    %c239_i32 = arith.constant 239 : i32
    %83 = tpu.dynamic_rotate %5 by %c239_i32 dim 1 : vector<4x256xf32>, i32 -> vector<4x256xf32>
    %c8 = arith.constant 8 : index
    %c0_42 = arith.constant 0 : index
    %84 = vector.load %arg5[%c8, %c0_42] : memref<9x256xf32, #tpu.memory_space<vmem>>, vector<1x256xf32>
    %85 = vector.broadcast %84 : vector<1x256xf32> to vector<4x256xf32>
    %86 = arith.mulf %83, %85 : vector<4x256xf32>
    %87 = arith.index_cast %arg1 : i32 to index
    %c8_43 = arith.constant 8 : index
    %c0_44 = arith.constant 0 : index
    %c0_45 = arith.constant 0 : index
    %88 = vector.load %arg3[%87, %c8_43, %c0_44, %c0_45] : memref<2x9x8x4xbf16, #tpu.memory_space<vmem>>, vector<1x1x8x4xbf16>
    %89 = vector.shape_cast %88 : vector<1x1x8x4xbf16> to vector<8x4xbf16>
    %90 = arith.truncf %86 : vector<4x256xf32> to vector<4x256xbf16>
    %cst_46 = arith.constant dense<0.000000e+00> : vector<8x256xf32>
    %91 = tpu.matmul %89, %90, %cst_46 {dimension_numbers = #tpu.dot_dimension_numbers<[1], [0], [0], [1], [0, 0, 1, 1], [], []>} : vector<8x4xbf16>, vector<4x256xbf16>, vector<8x256xf32> -> vector<8x256xf32>
    %92 = arith.addf %82, %91 : vector<8x256xf32>
    %cst_47 = arith.constant 0.000000e+00 : f32
    %93 = vector.broadcast %cst_47 : f32 to vector<8x256xf32>
    %94 = arith.maximumf %92, %93 : vector<8x256xf32>
    %95 = arith.index_cast %arg1 : i32 to index
    %c0_48 = arith.constant 0 : index
    %c0_49 = arith.constant 0 : index
    %96 = vector.load %arg4[%95, %c0_48, %c0_49] : memref<2x4x8xbf16, #tpu.memory_space<vmem>>, vector<1x4x8xbf16>
    %97 = vector.shape_cast %96 : vector<1x4x8xbf16> to vector<4x8xbf16>
    %98 = arith.truncf %94 : vector<8x256xf32> to vector<8x256xbf16>
    %cst_50 = arith.constant dense<0.000000e+00> : vector<4x256xf32>
    %99 = tpu.matmul %97, %98, %cst_50 {dimension_numbers = #tpu.dot_dimension_numbers<[1], [0], [0], [1], [0, 0, 1, 1], [], []>} : vector<4x8xbf16>, vector<8x256xbf16>, vector<4x256xf32> -> vector<4x256xf32>
    %100 = arith.addf %3, %99 : vector<4x256xf32>
    %c0_51 = arith.constant 0 : index
    %c0_52 = arith.constant 0 : index
    %101 = vector.load %arg7[%c0_51, %c0_52] : memref<4x256xf32, #tpu.memory_space<vmem>>, vector<4x256xf32>
    tpu.vector_store %arg7[%c0_51, %c0_52], %100 {strides = array<i32>} : memref<4x256xf32, #tpu.memory_space<vmem>>, vector<4x256xf32>,
    %c1_i32_53 = arith.constant 1 : i32
    %102 = arith.cmpi eq, %arg1, %c1_i32_53 : i32
    %103 = arith.extui %102 : i1 to i32
    %c0_i32_54 = arith.constant 0 : i32
    %104 = arith.cmpi ne, %103, %c0_i32_54 : i32
    scf.if %104 {
      %cst_55 = arith.constant 0.000000e+00 : f32
      %105 = vector.broadcast %cst_55 : f32 to vector<4x256xf32>
      %106 = arith.maximumf %100, %105 : vector<4x256xf32>
      %c0_56 = arith.constant 0 : index
      %c0_57 = arith.constant 0 : index
      %c0_58 = arith.constant 0 : index
      %107 = vector.load %arg6[%c0_56, %c0_57, %c0_58] : memref<1x4x256xf32, #tpu.memory_space<vmem>>, vector<1x4x256xf32>
      %108 = vector.shape_cast %107 : vector<1x4x256xf32> to vector<4x256xf32>
      %109 = vector.shape_cast %106 : vector<4x256xf32> to vector<1x4x256xf32>
      tpu.vector_store %arg6[%c0_56, %c0_57, %c0_58], %109 {strides = array<i32>} : memref<1x4x256xf32, #tpu.memory_space<vmem>>, vector<1x4x256xf32>,
    } else {
    }
    return
  }
  func.func @transform_0(%arg0: i32, %arg1: i32) -> (i32, i32, i32) {
    %c0_i32 = arith.constant 0 : i32
    %c0_i32_0 = arith.constant 0 : i32
    %c0_i32_1 = arith.constant 0 : i32
    return %arg0, %c0_i32, %c0_i32_0 : i32, i32, i32
  }
  func.func @transform_1(%arg0: i32, %arg1: i32) -> (i32, i32, i32, i32) {
    %c0_i32 = arith.constant 0 : i32
    %c0_i32_0 = arith.constant 0 : i32
    %c0_i32_1 = arith.constant 0 : i32
    %c0_i32_2 = arith.constant 0 : i32
    %c0_i32_3 = arith.constant 0 : i32
    return %c0_i32, %c0_i32_0, %c0_i32_1, %c0_i32_2 : i32, i32, i32, i32
  }
  func.func @transform_2(%arg0: i32, %arg1: i32) -> (i32, i32, i32) {
    %c0_i32 = arith.constant 0 : i32
    %c0_i32_0 = arith.constant 0 : i32
    %c0_i32_1 = arith.constant 0 : i32
    %c0_i32_2 = arith.constant 0 : i32
    return %c0_i32, %c0_i32_0, %c0_i32_1 : i32, i32, i32
  }
  func.func @transform_3(%arg0: i32, %arg1: i32) -> (i32, i32) {
    %c0_i32 = arith.constant 0 : i32
    %c0_i32_0 = arith.constant 0 : i32
    %c0_i32_1 = arith.constant 0 : i32
    return %c0_i32, %c0_i32_0 : i32, i32
  }
  func.func @transform_4(%arg0: i32, %arg1: i32) -> (i32, i32, i32) {
    %c0_i32 = arith.constant 0 : i32
    %c0_i32_0 = arith.constant 0 : i32
    %c0_i32_1 = arith.constant 0 : i32
    return %arg0, %c0_i32, %c0_i32_0 : i32, i32, i32
  }
}

</mosaic_0001>

<llo_original>
// kernel: tpu_custom_call.1
$region0: #{tpu_custom_call.1}
  #allocation0 [shape = 'u32[]', space=smem, size = 0x4, offset = 0x4, fixed_abs, tag = 'smem constant byte address 0x4 - core index']
  #allocation1 [shape = 'u32[144,128]{1,0:T(1,128)}', space=vmem, size = 0x12000, scoped, tag = 'internal scratch']
  #allocation2 [shape = 'f32[4,256]{1,0:T(4,128)}', space=vmem, size = 0x1000, scoped, tag = 'scratch operand']
  %s0 = inlined_call_operand.vmem [shape: f32[2,4,256], index: 0, kind: input, shape index: {}]
  %s1 = inlined_call_operand.vmem [shape: bf16[2,9,8,4], index: 1, kind: input, shape index: {}]
  %s2 = inlined_call_operand.vmem [shape: bf16[2,4,8], index: 2, kind: input, shape index: {}]
  %s3 = inlined_call_operand.vmem [shape: f32[9,256], index: 3, kind: input, shape index: {}]
  %s4 = inlined_call_operand.hbm [shape: f32[2,4,256], index: 4, kind: output, shape index: {}]
  %s5 = sld [smem:[#allocation0]]
  $region57: #{tpu_custom_call.1} parent=0
    _
  %s7 = ssub.s32 1, %s5
  %s8 = scalar_select 0, %s7, %s5
  $region1: #{tpu_custom_call.1} parent=0
    #allocation3 [shape = 'u8[8192]{0}', space=vmem, size = 0x2000, scoped, tag = 'output window, operand 0']
    #allocation4 [shape = 's32[2]{0}', space=sflag, size = 0x8, scoped, tag = 'scoped memory for tpu_custom_call.1']
    %9 = vsyncpa [#allocation4], 0
    %s10 = scalar_lea.sflag [#allocation4], 1
    %11 = vsyncpa %s10, 0
    loop: start=0, step=1, limit=6
    $region2: #{tpu_custom_call.1} parent=1 // loop_pre_header
      _
    $region3: #{tpu_custom_call.1} parent=1 // loop_header
      %s13 = sphi 0, %s17
      %p14 = scmp.ge.s32.totalorder %s13, 6
      %s20 = sphi 0, %s32
      %s21 = sphi 0, %s28
      %s22 = sphi 0, %s20
      %s23 = sphi 0, %s21
      %s24 = sphi 0, %s22
      %s25 = sphi 0, %s23
      %s35 = sphi 0, %s37
      %s38 = sphi 0, %s35
      %s39 = sphi 0, %s38
      %s55 = sphi 0, %s39
      %s59 = sphi 0, %s59
      %s61 = sphi 0, %s59
      %s62 = sphi 0, %s61
      %s76 = sphi 0, %s62
      %s80 = sphi 0, %s80
      %s82 = sphi 0, %s80
      %s83 = sphi 0, %s82
      %s97 = sphi 0, %s83
      %s101 = sphi 0, %s101
      %s103 = sphi 0, %s101
      %s104 = sphi 0, %s103
      %s118 = sphi 0, %s104
      %s124 = sphi 0, %s126
      %s127 = sphi 0, %s124
      %s128 = sphi 0, %s127
      %s144 = sphi 0, %s128
    $region4: #{tpu_custom_call.1} parent=1 // loop_header_branch
      %16 = sbr.rel (%p14) target = $region8
    $region5: #{tpu_custom_call.1} parent=1 // loop_body
      %s18 = ssub.s32 %s13, 1
      %s19 = ssub.s32 %s13, 2
      %s26 = sadd.s32 1, %s21
      %p27 = scmp.ge.s32.totalorder %s26, 2
      %s28 = scalar_select %p27, 0, %s26
      %s29 = sadd.s32 1, %s20
      %s30 = scalar_select %p27, %s29, %s20
      %p31 = scmp.ge.s32.totalorder %s30, 2
      %s32 = scalar_select %p31, 0, %s30
      %s33 = ssub.s32 %s20, %s32
      %p34 = scmp.eq.s32.totalorder %s33, 0
      %s36 = sadd.s32 %s35, 1
      %s37 = scalar_select %p34, %s35, %s36
      %p40 = pneg %p34
      %p41 = scmp.eq.s32.totalorder %s13, 3
      %p42 = por %p40, %p41
      %p43 = scmp.ne.s32.totalorder %s35, %s38
      %p44 = scmp.eq.s32.totalorder %s13, 0
      %p45 = por %p43, %p44
      %p46 = scmp.ne.s32.totalorder %s35, %s38
      %p47 = scmp.eq.s32.totalorder %s18, 3
      %p48 = por %p46, %p47
      %p49 = scmp.ne.s32.totalorder %s38, %s39
      %p50 = scmp.eq.s32.totalorder %s18, 0
      %p51 = por %p49, %p50
      %p52 = scmp.ne.s32.totalorder %s38, %s39
      %p53 = scmp.eq.s32.totalorder %s19, 3
      %p54 = por %p52, %p53
      %p56 = scmp.ne.s32.totalorder %s39, %s55
      %p57 = scmp.eq.s32.totalorder %s19, 0
      %p58 = por %p56, %p57
      %s60 = sadd.s32 %s59, 1
      %p63 = scmp.eq.s32.totalorder %s13, 3
      %p64 = scmp.ne.s32.totalorder %s59, %s61
      %p65 = scmp.eq.s32.totalorder %s13, 0
      %p66 = por %p64, %p65
      %p67 = scmp.ne.s32.totalorder %s59, %s61
      %p68 = scmp.eq.s32.totalorder %s18, 3
      %p69 = por %p67, %p68
      %p70 = scmp.ne.s32.totalorder %s61, %s62
      %p71 = scmp.eq.s32.totalorder %s18, 0
      %p72 = por %p70, %p71
      %p73 = scmp.ne.s32.totalorder %s61, %s62
      %p74 = scmp.eq.s32.totalorder %s19, 3
      %p75 = por %p73, %p74
      %p77 = scmp.ne.s32.totalorder %s62, %s76
      %p78 = scmp.eq.s32.totalorder %s19, 0
      %p79 = por %p77, %p78
      %s81 = sadd.s32 %s80, 1
      %p84 = scmp.eq.s32.totalorder %s13, 3
      %p85 = scmp.ne.s32.totalorder %s80, %s82
      %p86 = scmp.eq.s32.totalorder %s13, 0
      %p87 = por %p85, %p86
      %p88 = scmp.ne.s32.totalorder %s80, %s82
      %p89 = scmp.eq.s32.totalorder %s18, 3
      %p90 = por %p88, %p89
      %p91 = scmp.ne.s32.totalorder %s82, %s83
      %p92 = scmp.eq.s32.totalorder %s18, 0
      %p93 = por %p91, %p92
      %p94 = scmp.ne.s32.totalorder %s82, %s83
      %p95 = scmp.eq.s32.totalorder %s19, 3
      %p96 = por %p94, %p95
      %p98 = scmp.ne.s32.totalorder %s83, %s97
      %p99 = scmp.eq.s32.totalorder %s19, 0
      %p100 = por %p98, %p99
      %s102 = sadd.s32 %s101, 1
      %p105 = scmp.eq.s32.totalorder %s13, 3
      %p106 = scmp.ne.s32.totalorder %s101, %s103
      %p107 = scmp.eq.s32.totalorder %s13, 0
      %p108 = por %p106, %p107
      %p109 = scmp.ne.s32.totalorder %s101, %s103
      %p110 = scmp.eq.s32.totalorder %s18, 3
      %p111 = por %p109, %p110
      %p112 = scmp.ne.s32.totalorder %s103, %s104
      %p113 = scmp.eq.s32.totalorder %s18, 0
      %p114 = por %p112, %p113
      %p115 = scmp.ne.s32.totalorder %s103, %s104
      %p116 = scmp.eq.s32.totalorder %s19, 3
      %p117 = por %p115, %p116
      %p119 = scmp.ne.s32.totalorder %s104, %s118
      %p120 = scmp.eq.s32.totalorder %s19, 0
      %p121 = por %p119, %p120
      %s122 = ssub.s32 %s20, %s32
      %p123 = scmp.eq.s32.totalorder %s122, 0
      %s125 = sadd.s32 %s124, 1
      %s126 = scalar_select %p123, %s124, %s125
      %p129 = pneg %p123
      %p130 = scmp.eq.s32.totalorder %s13, 3
      %p131 = por %p129, %p130
      %p132 = scmp.ne.s32.totalorder %s124, %s127
      %p133 = scmp.eq.s32.totalorder %s13, 0
      %p134 = por %p132, %p133
      %p135 = scmp.ne.s32.totalorder %s124, %s127
      %p136 = scmp.eq.s32.totalorder %s18, 3
      %p137 = por %p135, %p136
      %p138 = scmp.ne.s32.totalorder %s127, %s128
      %p139 = scmp.eq.s32.totalorder %s18, 0
      %p140 = por %p138, %p139
      %p141 = scmp.ne.s32.totalorder %s127, %s128
      %p142 = scmp.eq.s32.totalorder %s19, 3
      %p143 = por %p141, %p142
      %p145 = scmp.ne.s32.totalorder %s128, %s144
      %p146 = scmp.eq.s32.totalorder %s19, 0
      %p147 = por %p145, %p146
      %p148 = scmp.le.s32.totalorder 1, %s13
      %p149 = scmp.lt.s32.totalorder %s13, 5
      %p150 = pnand %p148, %p149
      %p151 = pneg %p150
      // Predicated region
      $region9: #{tpu_custom_call.1} parent=5 // pred_check
        _
      $region10: #{tpu_custom_call.1} parent=5 // pred_check_branch
        %153 = sbr.rel (%p150) target = $region12
      $region11: #{tpu_custom_call.1} parent=5 // pred_region
        %s154 = ssub.s32 %s13, 1
        // Predicated region
        $region13: #{tpu_custom_call.1} parent=11 // pred_check
          %p155 = pneg %p72
        $region14: #{tpu_custom_call.1} parent=11 // pred_check_branch
          %157 = sbr.rel (%p155) target = $region16
        $region15: #{tpu_custom_call.1} parent=11 // pred_region
          _
        $region16: #{tpu_custom_call.1} parent=11 // pred_fallthru
          _
        // Predicated region
        $region17: #{tpu_custom_call.1} parent=11 // pred_check
          %p158 = pneg %p93
        $region18: #{tpu_custom_call.1} parent=11 // pred_check_branch
          %160 = sbr.rel (%p158) target = $region20
        $region19: #{tpu_custom_call.1} parent=11 // pred_region
          _
        $region20: #{tpu_custom_call.1} parent=11 // pred_fallthru
          _
        // Predicated region
        $region21: #{tpu_custom_call.1} parent=11 // pred_check
          %p161 = pneg %p114
        $region22: #{tpu_custom_call.1} parent=11 // pred_check_branch
          %163 = sbr.rel (%p161) target = $region24
        $region23: #{tpu_custom_call.1} parent=11 // pred_region
          _
        $region24: #{tpu_custom_call.1} parent=11 // pred_fallthru
          _
      $region12: #{tpu_custom_call.1} parent=5 // pred_fallthru
        _
      %p164 = scmp.lt.s32.totalorder %s13, 4
      // Predicated region
      $region25: #{tpu_custom_call.1} parent=5 // pred_check
        %p165 = pneg %p164
      $region26: #{tpu_custom_call.1} parent=5 // pred_check_branch
        %167 = sbr.rel (%p165) target = $region28
      $region27: #{tpu_custom_call.1} parent=5 // pred_region
        // Predicated region
        $region29: #{tpu_custom_call.1} parent=27 // pred_check
          %p168 = pneg %p45
        $region30: #{tpu_custom_call.1} parent=27 // pred_check_branch
          %170 = sbr.rel (%p168) target = $region32
        $region31: #{tpu_custom_call.1} parent=27 // pred_region
          %p171 = scmp.lt.s32.totalorder %s20, 1
          %s172 = scalar_select %p171, %s20, 1
          %s173 = smul.addr %s172, 2
          %s174 = smul.addr %s173, 4
          %s175 = scalar_lea.vmem %s0, %s174
        $region32: #{tpu_custom_call.1} parent=27 // pred_fallthru
          _
      $region28: #{tpu_custom_call.1} parent=5 // pred_fallthru
        _
      %p176 = scmp.le.s32.totalorder 1, %s13
      %p177 = scmp.lt.s32.totalorder %s13, 5
      %p178 = pnand %p176, %p177
      %p179 = pneg %p178
      // Predicated region
      $region33: #{tpu_custom_call.1} parent=5 // pred_check
        _
      $region34: #{tpu_custom_call.1} parent=5 // pred_check_branch
        %181 = sbr.rel (%p178) target = $region36
      $region35: #{tpu_custom_call.1} parent=5 // pred_region
        %s182 = ssub.s32 %s13, 1
        %p183 = scmp.lt.s32.totalorder %s22, 1
        %s184 = scalar_select %p183, %s22, 1
        %s185 = smul.addr %s184, 2
        %s186 = smul.addr %s185, 4
        %s187 = scalar_lea.vmem %s0, %s186
        %p188 = pneg %p51
        %p189 = pneg %p48
        %p190 = pneg %p72
        %p191 = pneg %p69
        %p192 = pneg %p93
        %p193 = pneg %p90
        %p194 = pneg %p114
        %p195 = pneg %p111
        %p196 = pneg %p140
        %p197 = pneg %p137
        %s198 = sand.u32 %s127, 1
        %s199 = scalar_lea.sflag [#allocation4], %s198
        %s200 = sand.u32 %s127, 1
        %s201 = smul.addr %s200, 8
        %s202 = scalar_lea.vmem [#allocation3], %s201
        %p203 = scmp.lt.s32.totalorder %s22, 1
        %s204 = scalar_select %p203, %s22, 1
        %s205 = smul.addr %s204, 2
        %s206 = smul.addr %s205, 4
        %s207 = scalar_lea.vmem %s0, %s206
        %p209 = scmp.eq.s32.totalorder %s23, 0
        // Predicated region
        $region37: #{tpu_custom_call.1} parent=35 // pred_check
          %p210 = pneg %p209
        $region38: #{tpu_custom_call.1} parent=35 // pred_check_branch
          %212 = sbr.rel (%p210) target = $region40
        $region39: #{tpu_custom_call.1} parent=35 // pred_region
          %v213 = vld [vmem:[%s207] sm:$0xff]
          %214 = vst [vmem:[#allocation2] sm:$0xff] %v213
        $region40: #{tpu_custom_call.1} parent=35 // pred_fallthru
          _
        %v215 = vld [vmem:[#allocation2] sm:$0xff]
        %v216 = vmax.f32 %v215, 0.0
        %v218 = vcombine.high %v216, %v216
        %220 = vrot.lane.b32.xlu0 %v216, 17
        %v221 = vpop.permute.xlu0 %220
        %222 = vrot.lane.b32.xlu0 %v218, 17
        %v223 = vpop.permute.xlu0 %222
        %v224 = vlaneseq
        %v225 = vand.u32 %v224, 127
        %vm226 = vcmp.lt.s32.totalorder %v225, 17
        %v227 = vsel %vm226, %v221, %v223
        %v228 = vsel %vm226, %v223, %v221
        %v229 = vld [vmem:[%s3] ss:$8 sm:$0x3]
        %v231 = vlaneseq
        %v232 = vshrl.u32 %v231, 7
        %v233 = vsub.s32 0, %v232
        %v234 = vrot.slane %v229, %v233
        %v235 = vlaneseq
        %v236 = vshrl.u32 %v235, 7
        %v237 = vsub.s32 1, %v236
        %v238 = vrot.slane %v229, %v237
        %v241 = vmul.f32 %v228, %v234
        %v242 = vmul.f32 %v227, %v238
        %s243 = smul.u32 %s23, 9
        %s244 = smul.addr %s243, 4
        %s245 = scalar_lea.vmem %s1, %s244
        %v246 = vld [vmem:[%s245] sm:$0xf]
        %v247 = vpack.c.bf16 %v241, %v241
        %v248 = vpack.c.bf16 %v242, %v242
        %249 = vrot.lane.b32.xlu0 %v216, 16
        %v250 = vpop.permute.xlu0 %249
        %251 = vrot.lane.b32.xlu0 %v218, 16
        %v252 = vpop.permute.xlu0 %251
        %vm253 = vcmp.lt.s32.totalorder %v225, 16
        %v254 = vsel %vm253, %v250, %v252
        %v255 = vsel %vm253, %v252, %v250
        %s256 = scalar_lea.vmem %s3, 1
        %v257 = vld [vmem:[%s256] ss:$8 sm:$0x3]
        %v259 = vlaneseq
        %v260 = vshrl.u32 %v259, 7
        %v261 = vsub.s32 0, %v260
        %v262 = vrot.slane %v257, %v261
        %v263 = vlaneseq
        %v264 = vshrl.u32 %v263, 7
        %v265 = vsub.s32 1, %v264
        %v266 = vrot.slane %v257, %v265
        %v269 = vmul.f32 %v255, %v262
        %v270 = vmul.f32 %v254, %v266
        %s271 = sadd.s32 1, %s243
        %s272 = smul.addr %s271, 4
        %s273 = scalar_lea.vmem %s1, %s272
        %v274 = vld [vmem:[%s273] sm:$0xf]
        %v275 = vpack.c.bf16 %v269, %v269
        %v276 = vpack.c.bf16 %v270, %v270
        %vm277 = vcmask 31744
        %v279 = vsel %vm277, %v274, 0
        %vm281 = vcmask 1041408
        %v283 = vsel %vm281, %v275, 0
        %v286 = vsel %vm281, %v276, 0
        %288 = vmatprep.subr.bf16.mxu0 0
        %289 = vmatpush1.bf16.msra.mxu0 0
        %290 = vmatprep.subr.bf16.mxu0 0
        %291 = vmatpush1.bf16.msra.mxu0 0
        %292 = vmatprep.subr.bf16.mxu0 0
        %293 = vmatpush1.bf16.msra.mxu0 0
        %294 = vmatprep.subr.bf16.mxu0 0
        %295 = vmatpush1.bf16.msra.mxu0 0
        %296 = vmatprep.subr.bf16.mxu0 0
        %297 = vmatpush1.bf16.msra.mxu0 0
        %298 = vmatprep.subr.bf16.mxu0 0
        %299 = vmatpush1.bf16.msra.mxu0 0
        %300 = vmatprep.subr.bf16.mxu0 0
        %301 = vmatpush1.bf16.msra.mxu0 0
        %302 = vmatprep.subr.bf16.mxu0 %v286
        %303 = vmatpush1.bf16.msra.mxu0 %v283
        %304 = vmatprep.subr.bf16.mxu0 0
        %305 = vmatpush2.bf16.msra.mxu0 0
        %306 = vmatprep.subr.bf16.mxu0 0
        %307 = vmatpush2.bf16.msra.mxu0 0
        %308 = vmatprep.subr.bf16.mxu0 0
        %309 = vmatpush2.bf16.msra.mxu0 0
        %310 = vmatprep.subr.bf16.mxu0 0
        %311 = vmatpush2.bf16.msra.mxu0 0
        %312 = vmatprep.subr.bf16.mxu0 0
        %313 = vmatpush2.bf16.msra.mxu0 0
        %314 = vmatprep.subr.bf16.mxu0 0
        %315 = vmatpush2.bf16.msra.mxu0 0
        %316 = vmatprep.subr.bf16.mxu0 0
        %317 = vmatpush2.bf16.msra.mxu0 0
        %318 = vmatprep.subr.bf16.mxu0 0
        %319 = vmatpush2.bf16.msra.mxu0 0
        %320 = vmatprep.mubr.bf16.mxu0 0
        %321 = vmatmul.mubr.bf16.gmra.mxu0 %v279
        %v322 = vpop.f32.mrf.mxu0
        %v323 = vadd.f32 0.0, %v322
        %v324 = vpop.f32.mrf.mxu0
        %v325 = vadd.f32 0.0, %v324
        %v326 = vpop.f32.mrf.mxu0
        %v327 = vpop.f32.mrf.mxu0
        %328 = vdwg.mxu0
        %v330 = vsel %vm277, %v246, 0
        %v333 = vsel %vm281, %v247, 0
        %v336 = vsel %vm281, %v248, 0
        %338 = vmatprep.subr.bf16.mxu0 0
        %339 = vmatpush1.bf16.msra.mxu0 0
        %340 = vmatprep.subr.bf16.mxu0 0
        %341 = vmatpush1.bf16.msra.mxu0 0
        %342 = vmatprep.subr.bf16.mxu0 0
        %343 = vmatpush1.bf16.msra.mxu0 0
        %344 = vmatprep.subr.bf16.mxu0 0
        %345 = vmatpush1.bf16.msra.mxu0 0
        %346 = vmatprep.subr.bf16.mxu0 0
        %347 = vmatpush1.bf16.msra.mxu0 0
        %348 = vmatprep.subr.bf16.mxu0 0
        %349 = vmatpush1.bf16.msra.mxu0 0
        %350 = vmatprep.subr.bf16.mxu0 0
        %351 = vmatpush1.bf16.msra.mxu0 0
        %352 = vmatprep.subr.bf16.mxu0 %v336
        %353 = vmatpush1.bf16.msra.mxu0 %v333
        %354 = vmatprep.subr.bf16.mxu0 0
        %355 = vmatpush2.bf16.msra.mxu0 0
        %356 = vmatprep.subr.bf16.mxu0 0
        %357 = vmatpush2.bf16.msra.mxu0 0
        %358 = vmatprep.subr.bf16.mxu0 0
        %359 = vmatpush2.bf16.msra.mxu0 0
        %360 = vmatprep.subr.bf16.mxu0 0
        %361 = vmatpush2.bf16.msra.mxu0 0
        %362 = vmatprep.subr.bf16.mxu0 0
        %363 = vmatpush2.bf16.msra.mxu0 0
        %364 = vmatprep.subr.bf16.mxu0 0
        %365 = vmatpush2.bf16.msra.mxu0 0
        %366 = vmatprep.subr.bf16.mxu0 0
        %367 = vmatpush2.bf16.msra.mxu0 0
        %368 = vmatprep.subr.bf16.mxu0 0
        %369 = vmatpush2.bf16.msra.mxu0 0
        %370 = vmatprep.mubr.bf16.mxu0 0
        %371 = vmatmul.mubr.bf16.gmra.mxu0 %v330
        %v372 = vpop.f32.mrf.mxu0
        %v373 = vadd.f32 %v323, %v372
        %v374 = vpop.f32.mrf.mxu0
        %v375 = vadd.f32 %v325, %v374
        %v376 = vpop.f32.mrf.mxu0
        %v377 = vpop.f32.mrf.mxu0
        %378 = vdwg.mxu0
        %379 = vrot.lane.b32.xlu0 %v216, 15
        %v380 = vpop.permute.xlu0 %379
        %381 = vrot.lane.b32.xlu0 %v218, 15
        %v382 = vpop.permute.xlu0 %381
        %vm383 = vcmp.lt.s32.totalorder %v225, 15
        %v384 = vsel %vm383, %v380, %v382
        %v385 = vsel %vm383, %v382, %v380
        %s386 = scalar_lea.vmem %s3, 2
        %v387 = vld [vmem:[%s386] ss:$8 sm:$0x3]
        %v389 = vlaneseq
        %v390 = vshrl.u32 %v389, 7
        %v391 = vsub.s32 0, %v390
        %v392 = vrot.slane %v387, %v391
        %v393 = vlaneseq
        %v394 = vshrl.u32 %v393, 7
        %v395 = vsub.s32 1, %v394
        %v396 = vrot.slane %v387, %v395
        %v399 = vmul.f32 %v385, %v392
        %v400 = vmul.f32 %v384, %v396
        %s401 = sadd.s32 2, %s243
        %s402 = smul.addr %s401, 4
        %s403 = scalar_lea.vmem %s1, %s402
        %v404 = vld [vmem:[%s403] sm:$0xf]
        %v405 = vpack.c.bf16 %v399, %v399
        %v406 = vpack.c.bf16 %v400, %v400
        %v408 = vsel %vm277, %v404, 0
        %v411 = vsel %vm281, %v405, 0
        %v414 = vsel %vm281, %v406, 0
        %416 = vmatprep.subr.bf16.mxu0 0
        %417 = vmatpush1.bf16.msra.mxu0 0
        %418 = vmatprep.subr.bf16.mxu0 0
        %419 = vmatpush1.bf16.msra.mxu0 0
        %420 = vmatprep.subr.bf16.mxu0 0
        %421 = vmatpush1.bf16.msra.mxu0 0
        %422 = vmatprep.subr.bf16.mxu0 0
        %423 = vmatpush1.bf16.msra.mxu0 0
        %424 = vmatprep.subr.bf16.mxu0 0
        %425 = vmatpush1.bf16.msra.mxu0 0
        %426 = vmatprep.subr.bf16.mxu0 0
        %427 = vmatpush1.bf16.msra.mxu0 0
        %428 = vmatprep.subr.bf16.mxu0 0
        %429 = vmatpush1.bf16.msra.mxu0 0
        %430 = vmatprep.subr.bf16.mxu0 %v414
        %431 = vmatpush1.bf16.msra.mxu0 %v411
        %432 = vmatprep.subr.bf16.mxu0 0
        %433 = vmatpush2.bf16.msra.mxu0 0
        %434 = vmatprep.subr.bf16.mxu0 0
        %435 = vmatpush2.bf16.msra.mxu0 0
        %436 = vmatprep.subr.bf16.mxu0 0
        %437 = vmatpush2.bf16.msra.mxu0 0
        %438 = vmatprep.subr.bf16.mxu0 0
        %439 = vmatpush2.bf16.msra.mxu0 0
        %440 = vmatprep.subr.bf16.mxu0 0
        %441 = vmatpush2.bf16.msra.mxu0 0
        %442 = vmatprep.subr.bf16.mxu0 0
        %443 = vmatpush2.bf16.msra.mxu0 0
        %444 = vmatprep.subr.bf16.mxu0 0
        %445 = vmatpush2.bf16.msra.mxu0 0
        %446 = vmatprep.subr.bf16.mxu0 0
        %447 = vmatpush2.bf16.msra.mxu0 0
        %448 = vmatprep.mubr.bf16.mxu0 0
        %449 = vmatmul.mubr.bf16.gmra.mxu0 %v408
        %v450 = vpop.f32.mrf.mxu0
        %v451 = vadd.f32 0.0, %v450
        %v452 = vpop.f32.mrf.mxu0
        %v453 = vadd.f32 0.0, %v452
        %v454 = vpop.f32.mrf.mxu0
        %v455 = vpop.f32.mrf.mxu0
        %456 = vdwg.mxu0
        %v457 = vadd.f32 %v373, %v451
        %v458 = vadd.f32 %v375, %v453
        %459 = vrot.lane.b32.xlu0 %v216, 1
        %v460 = vpop.permute.xlu0 %459
        %461 = vrot.lane.b32.xlu0 %v218, 1
        %v462 = vpop.permute.xlu0 %461
        %vm463 = vcmp.lt.s32.totalorder %v225, 1
        %v464 = vsel %vm463, %v460, %v462
        %v465 = vsel %vm463, %v462, %v460
        %s466 = scalar_lea.vmem %s3, 3
        %v467 = vld [vmem:[%s466] ss:$8 sm:$0x3]
        %v469 = vlaneseq
        %v470 = vshrl.u32 %v469, 7
        %v471 = vsub.s32 0, %v470
        %v472 = vrot.slane %v467, %v471
        %v473 = vlaneseq
        %v474 = vshrl.u32 %v473, 7
        %v475 = vsub.s32 1, %v474
        %v476 = vrot.slane %v467, %v475
        %v479 = vmul.f32 %v465, %v472
        %v480 = vmul.f32 %v464, %v476
        %s481 = sadd.s32 3, %s243
        %s482 = smul.addr %s481, 4
        %s483 = scalar_lea.vmem %s1, %s482
        %v484 = vld [vmem:[%s483] sm:$0xf]
        %v485 = vpack.c.bf16 %v479, %v479
        %v486 = vpack.c.bf16 %v480, %v480
        %v488 = vsel %vm277, %v484, 0
        %v491 = vsel %vm281, %v485, 0
        %v494 = vsel %vm281, %v486, 0
        %496 = vmatprep.subr.bf16.mxu0 0
        %497 = vmatpush1.bf16.msra.mxu0 0
        %498 = vmatprep.subr.bf16.mxu0 0
        %499 = vmatpush1.bf16.msra.mxu0 0
        %500 = vmatprep.subr.bf16.mxu0 0
        %501 = vmatpush1.bf16.msra.mxu0 0
        %502 = vmatprep.subr.bf16.mxu0 0
        %503 = vmatpush1.bf16.msra.mxu0 0
        %504 = vmatprep.subr.bf16.mxu0 0
        %505 = vmatpush1.bf16.msra.mxu0 0
        %506 = vmatprep.subr.bf16.mxu0 0
        %507 = vmatpush1.bf16.msra.mxu0 0
        %508 = vmatprep.subr.bf16.mxu0 0
        %509 = vmatpush1.bf16.msra.mxu0 0
        %510 = vmatprep.subr.bf16.mxu0 %v494
        %511 = vmatpush1.bf16.msra.mxu0 %v491
        %512 = vmatprep.subr.bf16.mxu0 0
        %513 = vmatpush2.bf16.msra.mxu0 0
        %514 = vmatprep.subr.bf16.mxu0 0
        %515 = vmatpush2.bf16.msra.mxu0 0
        %516 = vmatprep.subr.bf16.mxu0 0
        %517 = vmatpush2.bf16.msra.mxu0 0
        %518 = vmatprep.subr.bf16.mxu0 0
        %519 = vmatpush2.bf16.msra.mxu0 0
        %520 = vmatprep.subr.bf16.mxu0 0
        %521 = vmatpush2.bf16.msra.mxu0 0
        %522 = vmatprep.subr.bf16.mxu0 0
        %523 = vmatpush2.bf16.msra.mxu0 0
        %524 = vmatprep.subr.bf16.mxu0 0
        %525 = vmatpush2.bf16.msra.mxu0 0
        %526 = vmatprep.subr.bf16.mxu0 0
        %527 = vmatpush2.bf16.msra.mxu0 0
        %528 = vmatprep.mubr.bf16.mxu0 0
        %529 = vmatmul.mubr.bf16.gmra.mxu0 %v488
        %v530 = vpop.f32.mrf.mxu0
        %v531 = vadd.f32 0.0, %v530
        %v532 = vpop.f32.mrf.mxu0
        %v533 = vadd.f32 0.0, %v532
        %v534 = vpop.f32.mrf.mxu0
        %v535 = vpop.f32.mrf.mxu0
        %536 = vdwg.mxu0
        %v537 = vadd.f32 %v457, %v531
        %v538 = vadd.f32 %v458, %v533
        %s539 = sadd.s32 4, %s243
        %s540 = smul.addr %s539, 4
        %s541 = scalar_lea.vmem %s1, %s540
        %v542 = vld [vmem:[%s541] sm:$0xf]
        %v543 = vpack.c.bf16 %v216, %v216
        %v544 = vpack.c.bf16 %v218, %v218
        %v546 = vsel %vm277, %v542, 0
        %v549 = vsel %vm281, %v543, 0
        %v552 = vsel %vm281, %v544, 0
        %554 = vmatprep.subr.bf16.mxu0 0
        %555 = vmatpush1.bf16.msra.mxu0 0
        %556 = vmatprep.subr.bf16.mxu0 0
        %557 = vmatpush1.bf16.msra.mxu0 0
        %558 = vmatprep.subr.bf16.mxu0 0
        %559 = vmatpush1.bf16.msra.mxu0 0
        %560 = vmatprep.subr.bf16.mxu0 0
        %561 = vmatpush1.bf16.msra.mxu0 0
        %562 = vmatprep.subr.bf16.mxu0 0
        %563 = vmatpush1.bf16.msra.mxu0 0
        %564 = vmatprep.subr.bf16.mxu0 0
        %565 = vmatpush1.bf16.msra.mxu0 0
        %566 = vmatprep.subr.bf16.mxu0 0
        %567 = vmatpush1.bf16.msra.mxu0 0
        %568 = vmatprep.subr.bf16.mxu0 %v552
        %569 = vmatpush1.bf16.msra.mxu0 %v549
        %570 = vmatprep.subr.bf16.mxu0 0
        %571 = vmatpush2.bf16.msra.mxu0 0
        %572 = vmatprep.subr.bf16.mxu0 0
        %573 = vmatpush2.bf16.msra.mxu0 0
        %574 = vmatprep.subr.bf16.mxu0 0
        %575 = vmatpush2.bf16.msra.mxu0 0
        %576 = vmatprep.subr.bf16.mxu0 0
        %577 = vmatpush2.bf16.msra.mxu0 0
        %578 = vmatprep.subr.bf16.mxu0 0
        %579 = vmatpush2.bf16.msra.mxu0 0
        %580 = vmatprep.subr.bf16.mxu0 0
        %581 = vmatpush2.bf16.msra.mxu0 0
        %582 = vmatprep.subr.bf16.mxu0 0
        %583 = vmatpush2.bf16.msra.mxu0 0
        %584 = vmatprep.subr.bf16.mxu0 0
        %585 = vmatpush2.bf16.msra.mxu0 0
        %586 = vmatprep.mubr.bf16.mxu0 0
        %587 = vmatmul.mubr.bf16.gmra.mxu0 %v546
        %v588 = vpop.f32.mrf.mxu0
        %v589 = vadd.f32 0.0, %v588
        %v590 = vpop.f32.mrf.mxu0
        %v591 = vadd.f32 0.0, %v590
        %v592 = vpop.f32.mrf.mxu0
        %v593 = vpop.f32.mrf.mxu0
        %594 = vdwg.mxu0
        %v595 = vadd.f32 %v537, %v589
        %v596 = vadd.f32 %v538, %v591
        %597 = vrot.lane.b32.xlu0 %v216, 127
        %v598 = vpop.permute.xlu0 %597
        %599 = vrot.lane.b32.xlu0 %v218, 127
        %v600 = vpop.permute.xlu0 %599
        %vm601 = vcmp.lt.s32.totalorder %v225, 127
        %v602 = vsel %vm601, %v598, %v600
        %v603 = vsel %vm601, %v600, %v598
        %s604 = scalar_lea.vmem %s3, 5
        %v605 = vld [vmem:[%s604] ss:$8 sm:$0x3]
        %v607 = vlaneseq
        %v608 = vshrl.u32 %v607, 7
        %v609 = vsub.s32 0, %v608
        %v610 = vrot.slane %v605, %v609
        %v611 = vlaneseq
        %v612 = vshrl.u32 %v611, 7
        %v613 = vsub.s32 1, %v612
        %v614 = vrot.slane %v605, %v613
        %v617 = vmul.f32 %v602, %v610
        %v618 = vmul.f32 %v603, %v614
        %s619 = sadd.s32 5, %s243
        %s620 = smul.addr %s619, 4
        %s621 = scalar_lea.vmem %s1, %s620
        %v622 = vld [vmem:[%s621] sm:$0xf]
        %v623 = vpack.c.bf16 %v617, %v617
        %v624 = vpack.c.bf16 %v618, %v618
        %v626 = vsel %vm277, %v622, 0
        %v629 = vsel %vm281, %v623, 0
        %v632 = vsel %vm281, %v624, 0
        %634 = vmatprep.subr.bf16.mxu0 0
        %635 = vmatpush1.bf16.msra.mxu0 0
        %636 = vmatprep.subr.bf16.mxu0 0
        %637 = vmatpush1.bf16.msra.mxu0 0
        %638 = vmatprep.subr.bf16.mxu0 0
        %639 = vmatpush1.bf16.msra.mxu0 0
        %640 = vmatprep.subr.bf16.mxu0 0
        %641 = vmatpush1.bf16.msra.mxu0 0
        %642 = vmatprep.subr.bf16.mxu0 0
        %643 = vmatpush1.bf16.msra.mxu0 0
        %644 = vmatprep.subr.bf16.mxu0 0
        %645 = vmatpush1.bf16.msra.mxu0 0
        %646 = vmatprep.subr.bf16.mxu0 0
        %647 = vmatpush1.bf16.msra.mxu0 0
        %648 = vmatprep.subr.bf16.mxu0 %v632
        %649 = vmatpush1.bf16.msra.mxu0 %v629
        %650 = vmatprep.subr.bf16.mxu0 0
        %651 = vmatpush2.bf16.msra.mxu0 0
        %652 = vmatprep.subr.bf16.mxu0 0
        %653 = vmatpush2.bf16.msra.mxu0 0
        %654 = vmatprep.subr.bf16.mxu0 0
        %655 = vmatpush2.bf16.msra.mxu0 0
        %656 = vmatprep.subr.bf16.mxu0 0
        %657 = vmatpush2.bf16.msra.mxu0 0
        %658 = vmatprep.subr.bf16.mxu0 0
        %659 = vmatpush2.bf16.msra.mxu0 0
        %660 = vmatprep.subr.bf16.mxu0 0
        %661 = vmatpush2.bf16.msra.mxu0 0
        %662 = vmatprep.subr.bf16.mxu0 0
        %663 = vmatpush2.bf16.msra.mxu0 0
        %664 = vmatprep.subr.bf16.mxu0 0
        %665 = vmatpush2.bf16.msra.mxu0 0
        %666 = vmatprep.mubr.bf16.mxu0 0
        %667 = vmatmul.mubr.bf16.gmra.mxu0 %v626
        %v668 = vpop.f32.mrf.mxu0
        %v669 = vadd.f32 0.0, %v668
        %v670 = vpop.f32.mrf.mxu0
        %v671 = vadd.f32 0.0, %v670
        %v672 = vpop.f32.mrf.mxu0
        %v673 = vpop.f32.mrf.mxu0
        %674 = vdwg.mxu0
        %v675 = vadd.f32 %v595, %v669
        %v676 = vadd.f32 %v596, %v671
        %677 = vrot.lane.b32.xlu0 %v216, 113
        %v678 = vpop.permute.xlu0 %677
        %679 = vrot.lane.b32.xlu0 %v218, 113
        %v680 = vpop.permute.xlu0 %679
        %vm681 = vcmp.lt.s32.totalorder %v225, 113
        %v682 = vsel %vm681, %v678, %v680
        %v683 = vsel %vm681, %v680, %v678
        %s684 = scalar_lea.vmem %s3, 6
        %v685 = vld [vmem:[%s684] ss:$8 sm:$0x3]
        %v687 = vlaneseq
        %v688 = vshrl.u32 %v687, 7
        %v689 = vsub.s32 0, %v688
        %v690 = vrot.slane %v685, %v689
        %v691 = vlaneseq
        %v692 = vshrl.u32 %v691, 7
        %v693 = vsub.s32 1, %v692
        %v694 = vrot.slane %v685, %v693
        %v697 = vmul.f32 %v682, %v690
        %v698 = vmul.f32 %v683, %v694
        %s699 = sadd.s32 6, %s243
        %s700 = smul.addr %s699, 4
        %s701 = scalar_lea.vmem %s1, %s700
        %v702 = vld [vmem:[%s701] sm:$0xf]
        %v703 = vpack.c.bf16 %v697, %v697
        %v704 = vpack.c.bf16 %v698, %v698
        %v706 = vsel %vm277, %v702, 0
        %v709 = vsel %vm281, %v703, 0
        %v712 = vsel %vm281, %v704, 0
        %714 = vmatprep.subr.bf16.mxu0 0
        %715 = vmatpush1.bf16.msra.mxu0 0
        %716 = vmatprep.subr.bf16.mxu0 0
        %717 = vmatpush1.bf16.msra.mxu0 0
        %718 = vmatprep.subr.bf16.mxu0 0
        %719 = vmatpush1.bf16.msra.mxu0 0
        %720 = vmatprep.subr.bf16.mxu0 0
        %721 = vmatpush1.bf16.msra.mxu0 0
        %722 = vmatprep.subr.bf16.mxu0 0
        %723 = vmatpush1.bf16.msra.mxu0 0
        %724 = vmatprep.subr.bf16.mxu0 0
        %725 = vmatpush1.bf16.msra.mxu0 0
        %726 = vmatprep.subr.bf16.mxu0 0
        %727 = vmatpush1.bf16.msra.mxu0 0
        %728 = vmatprep.subr.bf16.mxu0 %v712
        %729 = vmatpush1.bf16.msra.mxu0 %v709
        %730 = vmatprep.subr.bf16.mxu0 0
        %731 = vmatpush2.bf16.msra.mxu0 0
        %732 = vmatprep.subr.bf16.mxu0 0
        %733 = vmatpush2.bf16.msra.mxu0 0
        %734 = vmatprep.subr.bf16.mxu0 0
        %735 = vmatpush2.bf16.msra.mxu0 0
        %736 = vmatprep.subr.bf16.mxu0 0
        %737 = vmatpush2.bf16.msra.mxu0 0
        %738 = vmatprep.subr.bf16.mxu0 0
        %739 = vmatpush2.bf16.msra.mxu0 0
        %740 = vmatprep.subr.bf16.mxu0 0
        %741 = vmatpush2.bf16.msra.mxu0 0
        %742 = vmatprep.subr.bf16.mxu0 0
        %743 = vmatpush2.bf16.msra.mxu0 0
        %744 = vmatprep.subr.bf16.mxu0 0
        %745 = vmatpush2.bf16.msra.mxu0 0
        %746 = vmatprep.mubr.bf16.mxu0 0
        %747 = vmatmul.mubr.bf16.gmra.mxu0 %v706
        %v748 = vpop.f32.mrf.mxu0
        %v749 = vadd.f32 0.0, %v748
        %v750 = vpop.f32.mrf.mxu0
        %v751 = vadd.f32 0.0, %v750
        %v752 = vpop.f32.mrf.mxu0
        %v753 = vpop.f32.mrf.mxu0
        %754 = vdwg.mxu0
        %v755 = vadd.f32 %v675, %v749
        %v756 = vadd.f32 %v676, %v751
        %757 = vrot.lane.b32.xlu0 %v216, 112
        %v758 = vpop.permute.xlu0 %757
        %759 = vrot.lane.b32.xlu0 %v218, 112
        %v760 = vpop.permute.xlu0 %759
        %vm761 = vcmp.lt.s32.totalorder %v225, 112
        %v762 = vsel %vm761, %v758, %v760
        %v763 = vsel %vm761, %v760, %v758
        %s764 = scalar_lea.vmem %s3, 7
        %v765 = vld [vmem:[%s764] ss:$8 sm:$0x3]
        %v767 = vlaneseq
        %v768 = vshrl.u32 %v767, 7
        %v769 = vsub.s32 0, %v768
        %v770 = vrot.slane %v765, %v769
        %v771 = vlaneseq
        %v772 = vshrl.u32 %v771, 7
        %v773 = vsub.s32 1, %v772
        %v774 = vrot.slane %v765, %v773
        %v777 = vmul.f32 %v762, %v770
        %v778 = vmul.f32 %v763, %v774
        %s779 = sadd.s32 7, %s243
        %s780 = smul.addr %s779, 4
        %s781 = scalar_lea.vmem %s1, %s780
        %v782 = vld [vmem:[%s781] sm:$0xf]
        %v783 = vpack.c.bf16 %v777, %v777
        %v784 = vpack.c.bf16 %v778, %v778
        %v786 = vsel %vm277, %v782, 0
        %v789 = vsel %vm281, %v783, 0
        %v792 = vsel %vm281, %v784, 0
        %794 = vmatprep.subr.bf16.mxu0 0
        %795 = vmatpush1.bf16.msra.mxu0 0
        %796 = vmatprep.subr.bf16.mxu0 0
        %797 = vmatpush1.bf16.msra.mxu0 0
        %798 = vmatprep.subr.bf16.mxu0 0
        %799 = vmatpush1.bf16.msra.mxu0 0
        %800 = vmatprep.subr.bf16.mxu0 0
        %801 = vmatpush1.bf16.msra.mxu0 0
        %802 = vmatprep.subr.bf16.mxu0 0
        %803 = vmatpush1.bf16.msra.mxu0 0
        %804 = vmatprep.subr.bf16.mxu0 0
        %805 = vmatpush1.bf16.msra.mxu0 0
        %806 = vmatprep.subr.bf16.mxu0 0
        %807 = vmatpush1.bf16.msra.mxu0 0
        %808 = vmatprep.subr.bf16.mxu0 %v792
        %809 = vmatpush1.bf16.msra.mxu0 %v789
        %810 = vmatprep.subr.bf16.mxu0 0
        %811 = vmatpush2.bf16.msra.mxu0 0
        %812 = vmatprep.subr.bf16.mxu0 0
        %813 = vmatpush2.bf16.msra.mxu0 0
        %814 = vmatprep.subr.bf16.mxu0 0
        %815 = vmatpush2.bf16.msra.mxu0 0
        %816 = vmatprep.subr.bf16.mxu0 0
        %817 = vmatpush2.bf16.msra.mxu0 0
        %818 = vmatprep.subr.bf16.mxu0 0
        %819 = vmatpush2.bf16.msra.mxu0 0
        %820 = vmatprep.subr.bf16.mxu0 0
        %821 = vmatpush2.bf16.msra.mxu0 0
        %822 = vmatprep.subr.bf16.mxu0 0
        %823 = vmatpush2.bf16.msra.mxu0 0
        %824 = vmatprep.subr.bf16.mxu0 0
        %825 = vmatpush2.bf16.msra.mxu0 0
        %826 = vmatprep.mubr.bf16.mxu0 0
        %827 = vmatmul.mubr.bf16.gmra.mxu0 %v786
        %v828 = vpop.f32.mrf.mxu0
        %v829 = vadd.f32 0.0, %v828
        %v830 = vpop.f32.mrf.mxu0
        %v831 = vadd.f32 0.0, %v830
        %v832 = vpop.f32.mrf.mxu0
        %v833 = vpop.f32.mrf.mxu0
        %834 = vdwg.mxu0
        %v835 = vadd.f32 %v755, %v829
        %v836 = vadd.f32 %v756, %v831
        %837 = vrot.lane.b32.xlu0 %v216, 111
        %v838 = vpop.permute.xlu0 %837
        %839 = vrot.lane.b32.xlu0 %v218, 111
        %v840 = vpop.permute.xlu0 %839
        %vm841 = vcmp.lt.s32.totalorder %v225, 111
        %v842 = vsel %vm841, %v838, %v840
        %v843 = vsel %vm841, %v840, %v838
        %s844 = scalar_lea.vmem %s3, 16
        %v845 = vld [vmem:[%s844] ss:$8 sm:$0x3]
        %v847 = vlaneseq
        %v848 = vshrl.u32 %v847, 7
        %v849 = vsub.s32 0, %v848
        %v850 = vrot.slane %v845, %v849
        %v851 = vlaneseq
        %v852 = vshrl.u32 %v851, 7
        %v853 = vsub.s32 1, %v852
        %v854 = vrot.slane %v845, %v853
        %v857 = vmul.f32 %v842, %v850
        %v858 = vmul.f32 %v843, %v854
        %s859 = sadd.s32 8, %s243
        %s860 = smul.addr %s859, 4
        %s861 = scalar_lea.vmem %s1, %s860
        %v862 = vld [vmem:[%s861] sm:$0xf]
        %v863 = vpack.c.bf16 %v857, %v857
        %v864 = vpack.c.bf16 %v858, %v858
        %v866 = vsel %vm277, %v862, 0
        %v869 = vsel %vm281, %v863, 0
        %v872 = vsel %vm281, %v864, 0
        %874 = vmatprep.subr.bf16.mxu0 0
        %875 = vmatpush1.bf16.msra.mxu0 0
        %876 = vmatprep.subr.bf16.mxu0 0
        %877 = vmatpush1.bf16.msra.mxu0 0
        %878 = vmatprep.subr.bf16.mxu0 0
        %879 = vmatpush1.bf16.msra.mxu0 0
        %880 = vmatprep.subr.bf16.mxu0 0
        %881 = vmatpush1.bf16.msra.mxu0 0
        %882 = vmatprep.subr.bf16.mxu0 0
        %883 = vmatpush1.bf16.msra.mxu0 0
        %884 = vmatprep.subr.bf16.mxu0 0
        %885 = vmatpush1.bf16.msra.mxu0 0
        %886 = vmatprep.subr.bf16.mxu0 0
        %887 = vmatpush1.bf16.msra.mxu0 0
        %888 = vmatprep.subr.bf16.mxu0 %v872
        %889 = vmatpush1.bf16.msra.mxu0 %v869
        %890 = vmatprep.subr.bf16.mxu0 0
        %891 = vmatpush2.bf16.msra.mxu0 0
        %892 = vmatprep.subr.bf16.mxu0 0
        %893 = vmatpush2.bf16.msra.mxu0 0
        %894 = vmatprep.subr.bf16.mxu0 0
        %895 = vmatpush2.bf16.msra.mxu0 0
        %896 = vmatprep.subr.bf16.mxu0 0
        %897 = vmatpush2.bf16.msra.mxu0 0
        %898 = vmatprep.subr.bf16.mxu0 0
        %899 = vmatpush2.bf16.msra.mxu0 0
        %900 = vmatprep.subr.bf16.mxu0 0
        %901 = vmatpush2.bf16.msra.mxu0 0
        %902 = vmatprep.subr.bf16.mxu0 0
        %903 = vmatpush2.bf16.msra.mxu0 0
        %904 = vmatprep.subr.bf16.mxu0 0
        %905 = vmatpush2.bf16.msra.mxu0 0
        %906 = vmatprep.mubr.bf16.mxu0 0
        %907 = vmatmul.mubr.bf16.gmra.mxu0 %v866
        %v908 = vpop.f32.mrf.mxu0
        %v909 = vadd.f32 0.0, %v908
        %v910 = vpop.f32.mrf.mxu0
        %v911 = vadd.f32 0.0, %v910
        %v912 = vpop.f32.mrf.mxu0
        %v913 = vpop.f32.mrf.mxu0
        %914 = vdwg.mxu0
        %v915 = vadd.f32 %v835, %v909
        %v916 = vadd.f32 %v836, %v911
        %v917 = vmax.f32 %v915, 0.0
        %v918 = vmax.f32 %v916, 0.0
        %s919 = smul.addr %s23, 2
        %s920 = scalar_lea.vmem %s2, %s919
        %v921 = vld [vmem:[%s920] sm:$0x3]
        %v922 = vpack.c.bf16 %v917, %v917
        %v923 = vpack.c.bf16 %v918, %v918
        %vm924 = vcmask 64512
        %v926 = vsel %vm924, %v921, 0
        %vm928 = vcmask 1043456
        %v930 = vsel %vm928, %v922, 0
        %v933 = vsel %vm928, %v923, 0
        %935 = vmatprep.subr.bf16.mxu0 0
        %936 = vmatpush1.bf16.msra.mxu0 0
        %937 = vmatprep.subr.bf16.mxu0 0
        %938 = vmatpush1.bf16.msra.mxu0 0
        %939 = vmatprep.subr.bf16.mxu0 0
        %940 = vmatpush1.bf16.msra.mxu0 0
        %941 = vmatprep.subr.bf16.mxu0 0
        %942 = vmatpush1.bf16.msra.mxu0 0
        %943 = vmatprep.subr.bf16.mxu0 0
        %944 = vmatpush1.bf16.msra.mxu0 0
        %945 = vmatprep.subr.bf16.mxu0 0
        %946 = vmatpush1.bf16.msra.mxu0 0
        %947 = vmatprep.subr.bf16.mxu0 0
        %948 = vmatpush1.bf16.msra.mxu0 0
        %949 = vmatprep.subr.bf16.mxu0 %v933
        %950 = vmatpush1.bf16.msra.mxu0 %v930
        %951 = vmatprep.subr.bf16.mxu0 0
        %952 = vmatpush2.bf16.msra.mxu0 0
        %953 = vmatprep.subr.bf16.mxu0 0
        %954 = vmatpush2.bf16.msra.mxu0 0
        %955 = vmatprep.subr.bf16.mxu0 0
        %956 = vmatpush2.bf16.msra.mxu0 0
        %957 = vmatprep.subr.bf16.mxu0 0
        %958 = vmatpush2.bf16.msra.mxu0 0
        %959 = vmatprep.subr.bf16.mxu0 0
        %960 = vmatpush2.bf16.msra.mxu0 0
        %961 = vmatprep.subr.bf16.mxu0 0
        %962 = vmatpush2.bf16.msra.mxu0 0
        %963 = vmatprep.subr.bf16.mxu0 0
        %964 = vmatpush2.bf16.msra.mxu0 0
        %965 = vmatprep.subr.bf16.mxu0 0
        %966 = vmatpush2.bf16.msra.mxu0 0
        %967 = vmatprep.mubr.bf16.mxu0 0
        %968 = vmatmul.mubr.bf16.gmra.mxu0 %v926
        %v969 = vpop.f32.mrf.mxu0
        %v970 = vadd.f32 0.0, %v969
        %v971 = vpop.f32.mrf.mxu0
        %v972 = vadd.f32 0.0, %v971
        %v973 = vpop.f32.mrf.mxu0
        %v974 = vpop.f32.mrf.mxu0
        %975 = vdwg.mxu0
        %v978 = vcombine.low %v970, %v972
        %v980 = vadd.f32 %v215, %v978
        %981 = vst [vmem:[#allocation2] sm:$0xff] %v980
        %p982 = scmp.eq.s32.totalorder %s23, 1
        // Predicated region
        $region41: #{tpu_custom_call.1} parent=35 // pred_check
          %p983 = pneg %p982
        $region42: #{tpu_custom_call.1} parent=35 // pred_check_branch
          %985 = sbr.rel (%p983) target = $region44
        $region43: #{tpu_custom_call.1} parent=35 // pred_region
          %v986 = vmax.f32 %v980, 0.0
          %987 = vst [vmem:[%s202] sm:$0xff] %v986
        $region44: #{tpu_custom_call.1} parent=35 // pred_fallthru
          _
        %s988 = sand.u32 %s127, 1
        %s989 = scalar_lea.sflag [#allocation4], %s988
        %s990 = sand.u32 %s127, 1
        %s991 = smul.addr %s990, 8
        %s992 = scalar_lea.vmem [#allocation3], %s991
        // Predicated region
        $region45: #{tpu_custom_call.1} parent=35 // pred_check
          %p993 = pneg %p137
        $region46: #{tpu_custom_call.1} parent=35 // pred_check_branch
          %995 = sbr.rel (%p993) target = $region48
        $region47: #{tpu_custom_call.1} parent=35 // pred_region
          %s997 = ssub.s32 128, 128
          %998 = vsyncadd %s989, %s997
          %s999 = smul.addr %s22, 2
          %s1000 = smul.addr %s999, 64
          %s1001 = scalar_lea.hbm %s4, %s1000
          %s1003 = sshll.u32 %s992, 4
          %s1004 = int_to_ptr.vmem [resolvable:$true] %s1003
          %1006 = dma.vmem_to_hbm [thread:$0]  %s1004, 128, %s1001, %s989
        $region48: #{tpu_custom_call.1} parent=35 // pred_fallthru
          _
      $region36: #{tpu_custom_call.1} parent=5 // pred_fallthru
        _
      %p1007 = scmp.le.s32.totalorder 2, %s13
      // Predicated region
      $region49: #{tpu_custom_call.1} parent=5 // pred_check
        %p1008 = pneg %p1007
      $region50: #{tpu_custom_call.1} parent=5 // pred_check_branch
        %1010 = sbr.rel (%p1008) target = $region52
      $region51: #{tpu_custom_call.1} parent=5 // pred_region
        %s1011 = ssub.s32 %s13, 2
        // Predicated region
        $region53: #{tpu_custom_call.1} parent=51 // pred_check
          %p1012 = pneg %p143
        $region54: #{tpu_custom_call.1} parent=51 // pred_check_branch
          %1014 = sbr.rel (%p1012) target = $region56
        $region55: #{tpu_custom_call.1} parent=51 // pred_region
          %s1015 = sand.u32 %s128, 1
          %s1016 = scalar_lea.sflag [#allocation4], %s1015
          %s1017 = sand.u32 %s128, 1
          %s1018 = smul.addr %s1017, 8
          %s1019 = scalar_lea.vmem [#allocation3], %s1018
          %1020 = dma.done %s1016, 128
        $region56: #{tpu_custom_call.1} parent=51 // pred_fallthru
          _
      $region52: #{tpu_custom_call.1} parent=5 // pred_fallthru
        _
    $region6: #{tpu_custom_call.1} parent=1 // loop_footer
      %s17 = sadd.s32 1, %s13
    $region7: #{tpu_custom_call.1} parent=1 // loop_footer_branch
      %12 = sbr.rel target = $region3
    $region8: #{tpu_custom_call.1} parent=1 // loop_exit
      _
    %1021 = vsyncpa [#allocation4], 1
    %s1022 = scalar_lea.sflag [#allocation4], 1
    %1023 = vsyncpa %s1022, 1

</llo_original>
